<compile_context>
chip_gen: v5e
topology: v5e:2x2
jax: 0.10.0
libtpu: 0.0.40
codegen_flags: <defaults>
</compile_context>

<pallas_src>
import functools
import numpy as np
import jax
import jax.numpy as jnp
from jax.experimental import pallas as pl
from jax.experimental.pallas import tpu as pltpu

LN_EPS = 1e-6  # matches nn.LayerNorm(d_model, eps=1e-06) in the reference


# ------------------------------------------------------------------
# Pallas kernels
# ------------------------------------------------------------------

def _mha_block_kernel(xq_ref, xkv_ref, m_ref, wq_ref, bq_ref, wkv_ref, bkv_ref,
                      wo_ref, bo_ref, g_ref, b_ref, o_ref, *,
                      n_head, d_k, d_v, scale):
    """Fused multi-head attention sub-layer (post-norm, residual) for one batch row."""
    xq = xq_ref[0]                       # (Lq, D)
    xkv = xkv_ref[0]                     # (Lk, D)
    keep = m_ref[0] > 0.0                # (Lq, Lk) bool, 1.0 keep / 0.0 mask

    # Fused projections: one matmul for Q, one for concatenated K|V.
    q = jnp.dot(xq, wq_ref[...], preferred_element_type=jnp.float32) + bq_ref[...]
    kv = jnp.dot(xkv, wkv_ref[...], preferred_element_type=jnp.float32) + bkv_ref[...]
    Hk = n_head * d_k

    # All heads handled inside this single grid step.  Output projection is
    # accumulated per head: sum_h ctx_h @ Wo[h] == concat(ctx_h) @ Wo.
    acc = jnp.zeros(xq.shape, jnp.float32)               # (Lq, D)
    for h in range(n_head):
        qh = q[:, h * d_k:(h + 1) * d_k]                  # (Lq, d_k)
        kh = kv[:, h * d_k:(h + 1) * d_k]                 # (Lk, d_k)
        vh = kv[:, Hk + h * d_v:Hk + (h + 1) * d_v]       # (Lk, d_v)
        s = jax.lax.dot_general(qh, kh, (((1,), (1,)), ((), ())),
                                preferred_element_type=jnp.float32) * scale
        s = jnp.where(keep, s, -1e9)
        s = s - jnp.max(s, axis=-1, keepdims=True)
        p = jnp.exp(s)
        p = p * pl.reciprocal(jnp.sum(p, axis=-1, keepdims=True), approx=True)
        ctx_h = jnp.dot(p, vh, preferred_element_type=jnp.float32)      # (Lq, d_v)
        acc = acc + jnp.dot(ctx_h, wo_ref[h * d_v:(h + 1) * d_v, :],
                            preferred_element_type=jnp.float32)

    o = acc + bo_ref[...] + xq                            # residual (pre-projection q)
    mu = jnp.mean(o, axis=-1, keepdims=True)
    oc = o - mu
    var = jnp.mean(oc * oc, axis=-1, keepdims=True)
    o_ref[0] = oc * jax.lax.rsqrt(var + LN_EPS) * g_ref[...] + b_ref[...]


def mha_block(p, xq, xkv, mask, n_head, d_k, d_v):
    """xq: (B, Lq, D), xkv: (B, Lk, D), mask: (B, Lq, Lk) float32."""
    B, Lq, D = xq.shape
    Lk = xkv.shape[1]
    Hq = n_head * d_k
    Hkv = n_head * (d_k + d_v)
    kern = functools.partial(_mha_block_kernel, n_head=n_head, d_k=d_k, d_v=d_v,
                             scale=1.0 / (d_k ** 0.5))
    return pl.pallas_call(
        kern,
        out_shape=jax.ShapeDtypeStruct((B, Lq, D), jnp.float32),
        grid=(B,),
        in_specs=[pl.BlockSpec((1, Lq, D), lambda b: (b, 0, 0)),
                  pl.BlockSpec((1, Lk, D), lambda b: (b, 0, 0)),
                  pl.BlockSpec((1, Lq, Lk), lambda b: (b, 0, 0)),
                  pl.BlockSpec((D, Hq), lambda b: (0, 0)),
                  pl.BlockSpec((1, Hq), lambda b: (0, 0)),
                  pl.BlockSpec((D, Hkv), lambda b: (0, 0)),
                  pl.BlockSpec((1, Hkv), lambda b: (0, 0)),
                  pl.BlockSpec((n_head * d_v, D), lambda b: (0, 0)),
                  pl.BlockSpec((1, D), lambda b: (0, 0)),
                  pl.BlockSpec((1, D), lambda b: (0, 0)),
                  pl.BlockSpec((1, D), lambda b: (0, 0))],
        out_specs=pl.BlockSpec((1, Lq, D), lambda b: (b, 0, 0)),
        compiler_params=pltpu.CompilerParams(dimension_semantics=("parallel",)),
    )(xq, xkv, mask, p['wq'], p['bq'], p['wkv'], p['bkv'], p['wo'], p['bo'],
      p['ln_g'], p['ln_b'])


def _ffn_block_kernel(x_ref, w1_ref, b1_ref, w2_ref, b2_ref, g_ref, b_ref, o_ref):
    """Fused position-wise FFN sub-layer: W2(relu(W1 x)) + x, then LayerNorm."""
    x = x_ref[0]                                          # (L, D)
    h = jnp.maximum(
        jnp.dot(x, w1_ref[...], preferred_element_type=jnp.float32) + b1_ref[...],
        0.0)
    y = jnp.dot(h, w2_ref[...], preferred_element_type=jnp.float32) + b2_ref[...] + x
    mu = jnp.mean(y, axis=-1, keepdims=True)
    yc = y - mu
    var = jnp.mean(yc * yc, axis=-1, keepdims=True)
    o_ref[0] = yc * jax.lax.rsqrt(var + LN_EPS) * g_ref[...] + b_ref[...]


def ffn_block(p, x):
    """x: (B, L, D)."""
    B, L, D = x.shape
    H = p['w1'].shape[1]
    return pl.pallas_call(
        _ffn_block_kernel,
        out_shape=jax.ShapeDtypeStruct((B, L, D), jnp.float32),
        grid=(B,),
        in_specs=[pl.BlockSpec((1, L, D), lambda b: (b, 0, 0)),
                  pl.BlockSpec((D, H), lambda b: (0, 0)),
                  pl.BlockSpec((1, H), lambda b: (0, 0)),
                  pl.BlockSpec((H, D), lambda b: (0, 0)),
                  pl.BlockSpec((1, D), lambda b: (0, 0)),
                  pl.BlockSpec((1, D), lambda b: (0, 0)),
                  pl.BlockSpec((1, D), lambda b: (0, 0))],
        out_specs=pl.BlockSpec((1, L, D), lambda b: (b, 0, 0)),
        compiler_params=pltpu.CompilerParams(dimension_semantics=("parallel",)),
    )(x, p['w1'], p['b1'], p['w2'], p['b2'], p['ln_g'], p['ln_b'])


def _ln_kernel(x_ref, g_ref, b_ref, o_ref):
    x = x_ref[...]
    mu = jnp.mean(x, axis=-1, keepdims=True)
    xc = x - mu
    var = jnp.mean(xc * xc, axis=-1, keepdims=True)
    o_ref[...] = xc * jax.lax.rsqrt(var + LN_EPS) * g_ref[...] + b_ref[...]


def pallas_layer_norm_2d(x2d, g2d, b2d):
    """x2d: (M, D), g2d/b2d: (1, D) (pre-reshaped at init)."""
    M, D = x2d.shape
    return pl.pallas_call(
        _ln_kernel,
        out_shape=jax.ShapeDtypeStruct((M, D), jnp.float32),
        grid=(1,),
        in_specs=[pl.BlockSpec((M, D), lambda i: (0, 0)),
                  pl.BlockSpec((1, D), lambda i: (0, 0)),
                  pl.BlockSpec((1, D), lambda i: (0, 0))],
        out_specs=pl.BlockSpec((M, D), lambda i: (0, 0)),
    )(x2d, g2d, b2d)


def _head_kernel(x_ref, w_ref, b_ref, o_ref):
    """Final fc + sigmoid fused."""
    z = jnp.dot(x_ref[...], w_ref[...], preferred_element_type=jnp.float32) + b_ref[...]
    o_ref[...] = 1.0 / (1.0 + jnp.exp(-z))


def pallas_head(x2d, w, b2d):
    M, K = x2d.shape
    N = w.shape[1]
    return pl.pallas_call(
        _head_kernel,
        out_shape=jax.ShapeDtypeStruct((M, N), jnp.float32),
        grid=(1,),
        in_specs=[pl.BlockSpec((M, K), lambda i: (0, 0)),
                  pl.BlockSpec((K, N), lambda i: (0, 0)),
                  pl.BlockSpec((1, N), lambda i: (0, 0))],
        out_specs=pl.BlockSpec((M, N), lambda i: (0, 0)),
    )(x2d, w, b2d)


# ------------------------------------------------------------------
# Model glue (plain JAX): embeddings, masks, reshapes
# ------------------------------------------------------------------

def layer_norm_rows(x, g2d, b2d):
    shp = x.shape
    y = pallas_layer_norm_2d(x.reshape(-1, shp[-1]), g2d, b2d)
    return y.reshape(shp)


def encoder_layer(p, x, mask, n_head, d_k, d_v):
    x = mha_block(p['slf'], x, x, mask, n_head, d_k, d_v)
    return ffn_block(p['ffn'], x)


def decoder_layer(p, x, enc_out, slf_mask, dec_enc_mask, n_head, d_k, d_v):
    x = mha_block(p['slf'], x, x, slf_mask, n_head, d_k, d_v)
    x = mha_block(p['enc'], x, enc_out, dec_enc_mask, n_head, d_k, d_v)
    return ffn_block(p['ffn'], x)


def get_pad_mask(seq, pad_idx):
    return (seq != pad_idx)[..., None, :]          # unsqueeze(-2)


def get_subsequent_mask(seq):
    L = seq.shape[1]
    return jnp.tril(jnp.ones((1, L, L), jnp.bool_))


def sinusoid_table(n_position, d_hid):
    pos = np.arange(n_position)[:, None].astype(np.float64)
    i = np.arange(d_hid)[None, :]
    angle = pos / np.power(10000.0, 2 * (i // 2) / d_hid)
    table = np.zeros((n_position, d_hid), np.float32)
    table[:, 0::2] = np.sin(angle[:, 0::2])
    table[:, 1::2] = np.cos(angle[:, 1::2])
    return jnp.asarray(table)


# ------------------------------ encoders / decoder ------------------------------

def action_encoder(p, inp, pad_mask, cfg):
    # inp: (B, S, 6, L) int32 ; pad_mask: (B, S, 1, L) bool
    prob = jnp.take(p['problem_emb'], inp[:, :, 0], axis=0)
    skill = jnp.take(p['skill_emb'], inp[:, :, 1], axis=0)
    corr = jnp.take(p['correct_emb'], inp[:, :, 2], axis=0)
    qno = jnp.take(p['qno_emb'], inp[:, :, 3], axis=0)
    x = corr + prob + skill + qno                        # (B, S, L, D)
    L = x.shape[2]
    # TODO(synk): PositionalEncoding(encoder_type='Action') source unavailable;
    # adding sinusoidal table along the action (within-session) axis.
    x = x + p['pos_table'][:L][None, None, :, :]
    B, S, L, D = x.shape
    x = pallas_layer_norm_2d(x.reshape(B * S * L, D),
                             p['ln_g'], p['ln_b']).reshape(B * S, L, D)
    # Mask built once (outside the layer loop), per batch row only (no head axis).
    mask = jnp.broadcast_to(pad_mask.reshape(B * S, 1, L),
                            (B * S, L, L)).astype(jnp.float32)
    for layer in p['layers']:
        x = encoder_layer(layer, x, mask, cfg['n_head'], cfg['d_k'], cfg['d_v'])
    return x.reshape(B, S, L, D)


def session_encoder(p, x, pad_mask, cfg):
    # x: (B, S, D), pad_mask: (B, S, S) bool
    B, S, D = x.shape
    x = x + p['pos_table'][:S][None]
    x = pallas_layer_norm_2d(x.reshape(B * S, D),
                             p['ln_g'], p['ln_b']).reshape(B, S, D)
    mask = pad_mask.astype(jnp.float32)
    for layer in p['layers']:
        # TODO(synk): Time_affect=True attention variant source unavailable;
        # using standard scaled-dot-product attention.
        x = encoder_layer(layer, x, mask, cfg['session_head'], cfg['d_k'], cfg['d_v'])
    return x


def pc_encoder(p, x, correct_pad, pad_mask, cfg):
    # x: (B, 1, D) session summary; correct_pad: (B, L); pad_mask: (1, L, L) bool
    cp_emb = jnp.take(p['cor_pad_emb'], correct_pad, axis=0)   # (B, L, D)
    x = cp_emb + x                                             # broadcast over L
    B, L, D = x.shape
    x = x + p['pos_table'][:L][None]
    x = pallas_layer_norm_2d(x.reshape(B * L, D),
                             p['ln_g'], p['ln_b']).reshape(B, L, D)
    mask = jnp.broadcast_to(pad_mask, (B, L, L)).astype(jnp.float32)
    for layer in p['layers']:
        x = encoder_layer(layer, x, mask, cfg['n_head'], cfg['d_k'], cfg['d_v'])
    return x


def h_decoder_fwd(p, prob_seq, skill_seq, trg_mask, pad_mask, enc_output,
                  qno, kno, cfg):
    # NOTE: kno is threaded through (as in the reference) but never embedded/used.
    x = (jnp.take(p['problem_emb'], prob_seq, axis=0)
         + jnp.take(p['skill_emb'], skill_seq, axis=0)
         + jnp.take(p['qno_emb'], qno, axis=0))
    B, L, D = x.shape
    x = x + p['pos_table'][:L][None]
    x = pallas_layer_norm_2d(x.reshape(B * L, D),
                             p['ln_g'], p['ln_b']).reshape(B, L, D)
    slf_mask = trg_mask.astype(jnp.float32)
    dec_enc_mask = pad_mask.astype(jnp.float32)
    for layer in p['layers']:
        x = decoder_layer(layer, x, enc_output, slf_mask, dec_enc_mask,
                          cfg['n_head'], cfg['d_k'], cfg['d_v'])
    return x


def hitskt_forward(params, input_array, session_size, padding_correct_value,
                   padding_node, EOS_skill, cfg):
    B = input_array.shape[0]
    # action encoder over the first `session_size` sessions
    pad_mask = get_pad_mask(input_array[:, :session_size, 2], padding_correct_value)
    action_enc_out = action_encoder(params['action'],
                                    input_array[:, :session_size], pad_mask, cfg)
    session_input = action_enc_out[:, :, -1, :]                     # (B, S, D)
    sess_seq = input_array[:, :-1, 2, 0]                            # (B, S)
    session_pad_mask = (get_subsequent_mask(sess_seq)
                        & get_pad_mask(sess_seq, padding_correct_value))  # (B, S, S)
    session_pad_mask = jnp.broadcast_to(session_pad_mask,
                                        (B,) + session_pad_mask.shape[1:])
    session_enc_out = session_encoder(params['session'], session_input,
                                      session_pad_mask, cfg)
    all_session_enc_out = session_enc_out[:, -1][:, None, :]        # (B, 1, D)

    correct_pad = input_array[:, session_size, 5]                   # (B, L)
    PC_mask = get_subsequent_mask(correct_pad)                      # (1, L, L)
    PC_enc_out = pc_encoder(params['pc'], all_session_enc_out, correct_pad, PC_mask, cfg)

    target_problem_seq = input_array[:, session_size, 0]
    target_skill_seq = input_array[:, session_size, 1]
    target_qno = input_array[:, session_size, 3]
    target_kno = input_array[:, session_size, 4]
    trg_mask = (get_subsequent_mask(target_problem_seq)
                & get_pad_mask(target_skill_seq, padding_node)
                & get_pad_mask(target_skill_seq, EOS_skill))        # (B, L, L)
    trg_mask = jnp.broadcast_to(trg_mask, (B,) + trg_mask.shape[1:])

    dec_out = h_decoder_fwd(params['dec'], target_problem_seq, target_skill_seq,
                            trg_mask, trg_mask, PC_enc_out, target_qno, target_kno, cfg)
    B, L, E = dec_out.shape
    out = pallas_head(dec_out.reshape(B * L, E),
                      params['fc1']['w'], params['fc1']['b'])       # (B*L, 1) sigmoid
    return out.reshape(B, L)


# ------------------------------------------------------------------
# Deterministic parameter initialization (fused layout)
# ------------------------------------------------------------------

class KeyGen:
    def __init__(self, key):
        self.key = key

    def __call__(self):
        self.key, sub = jax.random.split(self.key)
        return sub


def init_params(key, cfg):
    kg = KeyGen(key)
    D, E, H = cfg['d_model'], cfg['embedding_size'], cfg['d_inner']

    def emb(n):
        return jax.random.normal(kg(), (n, E), jnp.float32) * 0.05

    def wmat(din, dout):
        return jax.random.normal(kg(), (din, dout), jnp.float32) * 0.05

    def mha_p(n_head, d_k, d_v):
        Hq = n_head * d_k
        Hkv = n_head * (d_k + d_v)
        return dict(wq=wmat(D, Hq), bq=jnp.zeros((1, Hq), jnp.float32),
                    wkv=wmat(D, Hkv), bkv=jnp.zeros((1, Hkv), jnp.float32),
                    wo=wmat(n_head * d_v, D), bo=jnp.zeros((1, D), jnp.float32),
                    ln_g=jnp.ones((1, D), jnp.float32),
                    ln_b=jnp.zeros((1, D), jnp.float32))

    def ffn_p():
        return dict(w1=wmat(D, H), b1=jnp.zeros((1, H), jnp.float32),
                    w2=wmat(H, D), b2=jnp.zeros((1, D), jnp.float32),
                    ln_g=jnp.ones((1, D), jnp.float32),
                    ln_b=jnp.zeros((1, D), jnp.float32))

    def enc_layer(n_head):
        return dict(slf=mha_p(n_head, cfg['d_k'], cfg['d_v']), ffn=ffn_p())

    def dec_layer():
        return dict(slf=mha_p(cfg['n_head'], cfg['d_k'], cfg['d_v']),
                    enc=mha_p(cfg['n_head'], cfg['d_k'], cfg['d_v']), ffn=ffn_p())

    def ln_pair():
        return (jnp.ones((1, D), jnp.float32), jnp.zeros((1, D), jnp.float32))

    g, b = ln_pair()
    action = dict(problem_emb=emb(cfg['n_type_problem']), skill_emb=emb(cfg['n_type_skill']),
                  correct_emb=emb(cfg['n_type_correctness']), qno_emb=emb(cfg['n_type_qno']),
                  pos_table=sinusoid_table(cfg['action_position'], E),
                  ln_g=g, ln_b=b,
                  layers=[enc_layer(cfg['n_head']) for _ in range(cfg['n_layers'])])
    g, b = ln_pair()
    session = dict(pos_table=sinusoid_table(cfg['session_position'], E),
                   ln_g=g, ln_b=b,
                   layers=[enc_layer(cfg['session_head']) for _ in range(cfg['session_layer'])])
    g, b = ln_pair()
    pc = dict(cor_pad_emb=emb(cfg['n_type_correctness']),
              pos_table=sinusoid_table(cfg['action_position'], E),
              ln_g=g, ln_b=b,
              layers=[enc_layer(cfg['n_head']) for _ in range(cfg['n_layers'])])
    g, b = ln_pair()
    dec = dict(problem_emb=emb(cfg['n_type_problem']), skill_emb=emb(cfg['n_type_skill']),
               qno_emb=emb(cfg['n_type_qno']),
               pos_table=sinusoid_table(cfg['action_position'], E),
               ln_g=g, ln_b=b,
               layers=[dec_layer() for _ in range(cfg['n_layers'])])
    fc1 = dict(w=wmat(E, 1), b=jnp.zeros((1, 1), jnp.float32))
    return dict(action=action, session=session, pc=pc, dec=dec, fc1=fc1)


# ------------------------------------------------------------------
# Main
# ------------------------------------------------------------------

if __name__ == "__main__":
    cfg = dict(embedding_size=32, d_model=32, d_inner=64,
               n_layers=1, n_head=2, d_k=16, d_v=16,
               action_position=64, session_position=16,
               n_type_correctness=6, n_type_problem=20, n_type_skill=10,
               session_head=2, session_layer=1, n_type_qno=20, n_type_kno=20)

    params = init_params(jax.random.PRNGKey(0), cfg)

    B, num_sessions, L = 2, 4, 8        # input_array: (B, num_sessions, 6, L)
    session_size = num_sessions - 1
    padding_correct_value = 0
    padding_node = 0
    EOS_skill = cfg['n_type_skill'] - 1

    keys = jax.random.split(jax.random.PRNGKey(0), 6)
    prob = jax.random.randint(keys[0], (B, num_sessions, L), 1, cfg['n_type_problem'])
    skill = jax.random.randint(keys[1], (B, num_sessions, L), 1, cfg['n_type_skill'] - 1)
    corr = jax.random.randint(keys[2], (B, num_sessions, L), 1, cfg['n_type_correctness'])
    qno = jax.random.randint(keys[3], (B, num_sessions, L), 0, cfg['n_type_qno'])
    kno = jax.random.randint(keys[4], (B, num_sessions, L), 0, cfg['n_type_kno'])
    cpad = jax.random.randint(keys[5], (B, num_sessions, L), 1, cfg['n_type_correctness'])
    input_array = jnp.stack([prob, skill, corr, qno, kno, cpad], axis=2).astype(jnp.int32)

    out = hitskt_forward(params, input_array, session_size,
                         padding_correct_value, padding_node, EOS_skill, cfg)
    out = jax.block_until_ready(out)
    assert out.shape == (B, L), out.shape
    assert bool(jnp.all(jnp.isfinite(out)))
    print("KERNEL_OK")
</pallas_src>

<mosaic_0001>
module attributes {stable_mosaic.version = 11 : i64} {
  func.func @_ln_kernel(%arg0: i32, %arg1: memref<48x32xf32, #tpu.memory_space<vmem>>, %arg2: memref<1x32xf32, #tpu.memory_space<vmem>>, %arg3: memref<1x32xf32, #tpu.memory_space<vmem>>, %arg4: memref<48x32xf32, #tpu.memory_space<vmem>>) attributes {dimension_semantics = [#tpu.dimension_semantics<arbitrary>], iteration_bounds = array<i64: 1>, scalar_prefetch = 0 : i64, scratch_operands = 0 : i64, tpu.core_type = #tpu.core_type<tc>, window_params = [{pipeline_mode = #tpu.pipeline_mode<synchronous>, transform_indices = @transform_0, window_bounds = array<i64: 48, 32>}, {pipeline_mode = #tpu.pipeline_mode<synchronous>, transform_indices = @transform_1, window_bounds = array<i64: 1, 32>}, {pipeline_mode = #tpu.pipeline_mode<synchronous>, transform_indices = @transform_2, window_bounds = array<i64: 1, 32>}, {pipeline_mode = #tpu.pipeline_mode<synchronous>, transform_indices = @transform_3, window_bounds = array<i64: 48, 32>}]} {
    %c0 = arith.constant 0 : index
    %c0_0 = arith.constant 0 : index
    %0 = vector.load %arg1[%c0, %c0_0] : memref<48x32xf32, #tpu.memory_space<vmem>>, vector<48x32xf32>
    %cst = arith.constant dense<0.000000e+00> : vector<48xf32>
    %1 = vector.multi_reduction <add>, %0, %cst [1] : vector<48x32xf32> to vector<48xf32>
    %2 = vector.shape_cast %1 : vector<48xf32> to vector<48x1xf32>
    %cst_1 = arith.constant 3.200000e+01 : f32
    %3 = vector.broadcast %cst_1 : f32 to vector<48x1xf32>
    %4 = arith.divf %2, %3 : vector<48x1xf32>
    %5 = vector.broadcast %4 : vector<48x1xf32> to vector<48x32xf32>
    %6 = arith.subf %0, %5 : vector<48x32xf32>
    %7 = arith.mulf %6, %6 : vector<48x32xf32>
    %cst_2 = arith.constant dense<0.000000e+00> : vector<48xf32>
    %8 = vector.multi_reduction <add>, %7, %cst_2 [1] : vector<48x32xf32> to vector<48xf32>
    %9 = vector.shape_cast %8 : vector<48xf32> to vector<48x1xf32>
    %cst_3 = arith.constant 3.200000e+01 : f32
    %10 = vector.broadcast %cst_3 : f32 to vector<48x1xf32>
    %11 = arith.divf %9, %10 : vector<48x1xf32>
    %cst_4 = arith.constant 9.99999997E-7 : f32
    %12 = vector.broadcast %cst_4 : f32 to vector<48x1xf32>
    %13 = arith.addf %11, %12 : vector<48x1xf32>
    %14 = math.rsqrt %13 : vector<48x1xf32>
    %15 = vector.broadcast %14 : vector<48x1xf32> to vector<48x32xf32>
    %16 = arith.mulf %6, %15 : vector<48x32xf32>
    %c0_5 = arith.constant 0 : index
    %c0_6 = arith.constant 0 : index
    %17 = vector.load %arg2[%c0_5, %c0_6] : memref<1x32xf32, #tpu.memory_space<vmem>>, vector<1x32xf32>
    %18 = vector.broadcast %17 : vector<1x32xf32> to vector<48x32xf32>
    %19 = arith.mulf %16, %18 : vector<48x32xf32>
    %c0_7 = arith.constant 0 : index
    %c0_8 = arith.constant 0 : index
    %20 = vector.load %arg3[%c0_7, %c0_8] : memref<1x32xf32, #tpu.memory_space<vmem>>, vector<1x32xf32>
    %21 = vector.broadcast %20 : vector<1x32xf32> to vector<48x32xf32>
    %22 = arith.addf %19, %21 : vector<48x32xf32>
    %c0_9 = arith.constant 0 : index
    %c0_10 = arith.constant 0 : index
    %23 = vector.load %arg4[%c0_9, %c0_10] : memref<48x32xf32, #tpu.memory_space<vmem>>, vector<48x32xf32>
    tpu.vector_store %arg4[%c0_9, %c0_10], %22 {strides = array<i32>} : memref<48x32xf32, #tpu.memory_space<vmem>>, vector<48x32xf32>,
    return
  }
  func.func @transform_0(%arg0: i32) -> (i32, i32) {
    %c0_i32 = arith.constant 0 : i32
    %c0_i32_0 = arith.constant 0 : i32
    %c0_i32_1 = arith.constant 0 : i32
    return %c0_i32, %c0_i32_0 : i32, i32
  }
  func.func @transform_1(%arg0: i32) -> (i32, i32) {
    %c0_i32 = arith.constant 0 : i32
    %c0_i32_0 = arith.constant 0 : i32
    %c0_i32_1 = arith.constant 0 : i32
    return %c0_i32, %c0_i32_0 : i32, i32
  }
  func.func @transform_2(%arg0: i32) -> (i32, i32) {
    %c0_i32 = arith.constant 0 : i32
    %c0_i32_0 = arith.constant 0 : i32
    %c0_i32_1 = arith.constant 0 : i32
    return %c0_i32, %c0_i32_0 : i32, i32
  }
  func.func @transform_3(%arg0: i32) -> (i32, i32) {
    %c0_i32 = arith.constant 0 : i32
    %c0_i32_0 = arith.constant 0 : i32
    %c0_i32_1 = arith.constant 0 : i32
    return %c0_i32, %c0_i32_0 : i32, i32
  }
}

</mosaic_0001>

<llo_original>
// kernel: tpu_custom_call.1
$region0: #{tpu_custom_call.1}
  #allocation0 [shape = 'u32[]', space=smem, size = 0x4, offset = 0x4, fixed_abs, tag = 'smem constant byte address 0x4 - core index']
  #allocation1 [shape = 'u32[72,128]{1,0:T(1,128)}', space=vmem, size = 0x9000, scoped, tag = 'internal scratch']
  %s0 = inlined_call_operand.vmem [shape: f32[48,32], index: 0, kind: input, shape index: {}]
  %s1 = inlined_call_operand.vmem [shape: f32[1,32], index: 1, kind: input, shape index: {}]
  %s2 = inlined_call_operand.vmem [shape: f32[1,32], index: 2, kind: input, shape index: {}]
  %s3 = inlined_call_operand.vmem [shape: f32[48,32], index: 3, kind: output, shape index: {}]
  %s4 = sld [smem:[#allocation0]]
  $region22: #{tpu_custom_call.1} parent=0
    _
  %s6 = ssub.s32 1, %s4
  %s7 = scalar_select 0, %s6, %s4
  // Predicated region
  $region2: #{tpu_custom_call.1} parent=0 // pred_check
    _
  $region3: #{tpu_custom_call.1} parent=0 // pred_check_branch
    %9 = sbr.rel (0) target = $region5
  $region4: #{tpu_custom_call.1} parent=0 // pred_region
    _
  $region5: #{tpu_custom_call.1} parent=0 // pred_fallthru
    _
  // Predicated region
  $region6: #{tpu_custom_call.1} parent=0 // pred_check
    _
  $region7: #{tpu_custom_call.1} parent=0 // pred_check_branch
    %11 = sbr.rel (0) target = $region9
  $region8: #{tpu_custom_call.1} parent=0 // pred_region
    _
  $region9: #{tpu_custom_call.1} parent=0 // pred_fallthru
    _
  // Predicated region
  $region10: #{tpu_custom_call.1} parent=0 // pred_check
    _
  $region11: #{tpu_custom_call.1} parent=0 // pred_check_branch
    %13 = sbr.rel (0) target = $region13
  $region12: #{tpu_custom_call.1} parent=0 // pred_region
    _
  $region13: #{tpu_custom_call.1} parent=0 // pred_fallthru
    _
  %v14 = vld [vmem:[%s0] sm:$0xff]
  %v15 = vld [vmem:[%s0 + $0x8] sm:$0xff]
  %v16 = vld [vmem:[%s0 + $0x10] sm:$0xff]
  %v17 = vld [vmem:[%s0 + $0x18] sm:$0xff]
  %v18 = vld [vmem:[%s0 + $0x20] sm:$0xff]
  %v19 = vld [vmem:[%s0 + $0x28] sm:$0xff]
  %vm20 = vcmask 261120
  %v21 = vsel %vm20, %v14, 0.0
  %22 = vadd.xlane.f32.xlu0 %v21
  %v23 = vpop.xlane.xlu0 %22
  %v24 = vsel %vm20, %v15, 0.0
  %25 = vadd.xlane.f32.xlu0 %v24
  %v26 = vpop.xlane.xlu0 %25
  %v27 = vsel %vm20, %v16, 0.0
  %28 = vadd.xlane.f32.xlu0 %v27
  %v29 = vpop.xlane.xlu0 %28
  %v30 = vsel %vm20, %v17, 0.0
  %31 = vadd.xlane.f32.xlu0 %v30
  %v32 = vpop.xlane.xlu0 %31
  %v33 = vsel %vm20, %v18, 0.0
  %34 = vadd.xlane.f32.xlu0 %v33
  %v35 = vpop.xlane.xlu0 %34
  %v36 = vsel %vm20, %v19, 0.0
  %37 = vadd.xlane.f32.xlu0 %v36
  %v38 = vpop.xlane.xlu0 %37
  %v39 = vrcp.pop 32.0
  %v40 = vmul.f32 32.0, %v39
  %v41 = vsub.f32 1.0, %v40
  %v42 = vmul.f32 %v39, %v41
  %v43 = vadd.f32 %v39, %v42
  %vm44 = vweird.f32 %v39
  %v45 = vsel %vm44, %v39, %v43
  %v46 = vmul.f32 %v23, %v45
  %v47 = vmul.f32 %v26, %v45
  %v48 = vmul.f32 %v29, %v45
  %v49 = vmul.f32 %v32, %v45
  %v50 = vmul.f32 %v35, %v45
  %v51 = vmul.f32 %v38, %v45
  %v52 = vsub.f32 %v14, %v46
  %v53 = vsub.f32 %v15, %v47
  %v54 = vsub.f32 %v16, %v48
  %v55 = vsub.f32 %v17, %v49
  %v56 = vsub.f32 %v18, %v50
  %v57 = vsub.f32 %v19, %v51
  %v58 = vmul.f32 %v52, %v52
  %v59 = vmul.f32 %v53, %v53
  %v60 = vmul.f32 %v54, %v54
  %v61 = vmul.f32 %v55, %v55
  %v62 = vmul.f32 %v56, %v56
  %v63 = vmul.f32 %v57, %v57
  %v64 = vsel %vm20, %v58, 0.0
  %65 = vadd.xlane.f32.xlu0 %v64
  %v66 = vpop.xlane.xlu0 %65
  %v67 = vsel %vm20, %v59, 0.0
  %68 = vadd.xlane.f32.xlu0 %v67
  %v69 = vpop.xlane.xlu0 %68
  %v70 = vsel %vm20, %v60, 0.0
  %71 = vadd.xlane.f32.xlu0 %v70
  %v72 = vpop.xlane.xlu0 %71
  %v73 = vsel %vm20, %v61, 0.0
  %74 = vadd.xlane.f32.xlu0 %v73
  %v75 = vpop.xlane.xlu0 %74
  %v76 = vsel %vm20, %v62, 0.0
  %77 = vadd.xlane.f32.xlu0 %v76
  %v78 = vpop.xlane.xlu0 %77
  %v79 = vsel %vm20, %v63, 0.0
  %80 = vadd.xlane.f32.xlu0 %v79
  %v81 = vpop.xlane.xlu0 %80
  %v82 = vmul.f32 %v66, %v45
  %v83 = vmul.f32 %v69, %v45
  %v84 = vmul.f32 %v72, %v45
  %v85 = vmul.f32 %v75, %v45
  %v86 = vmul.f32 %v78, %v45
  %v87 = vmul.f32 %v81, %v45
  %v88 = vadd.f32 %v82, 1e-06
  %v89 = vadd.f32 %v83, 1e-06
  %v90 = vadd.f32 %v84, 1e-06
  %v91 = vadd.f32 %v85, 1e-06
  %v92 = vadd.f32 %v86, 1e-06
  %v93 = vadd.f32 %v87, 1e-06
  %v94 = vrsqrt.pop %v88
  %v95 = vmul.f32 %v94, %v88
  %v96 = vmul.f32 %v95, %v94
  %v97 = vmul.f32 0.5, %v96
  %v98 = vsub.f32 1.5, %v97
  %v99 = vmul.f32 %v94, %v98
  %vm100 = vweird.f32 %v88
  %vm101 = vweird.f32 %v94
  %vm102 = vmor %vm100, %vm101
  %v103 = vsel %vm102, %v94, %v99
  %v104 = vrsqrt.pop %v89
  %v105 = vmul.f32 %v104, %v89
  %v106 = vmul.f32 %v105, %v104
  %v107 = vmul.f32 0.5, %v106
  %v108 = vsub.f32 1.5, %v107
  %v109 = vmul.f32 %v104, %v108
  %vm110 = vweird.f32 %v89
  %vm111 = vweird.f32 %v104
  %vm112 = vmor %vm110, %vm111
  %v113 = vsel %vm112, %v104, %v109
  %v114 = vrsqrt.pop %v90
  %v115 = vmul.f32 %v114, %v90
  %v116 = vmul.f32 %v115, %v114
  %v117 = vmul.f32 0.5, %v116
  %v118 = vsub.f32 1.5, %v117
  %v119 = vmul.f32 %v114, %v118
  %vm120 = vweird.f32 %v90
  %vm121 = vweird.f32 %v114
  %vm122 = vmor %vm120, %vm121
  %v123 = vsel %vm122, %v114, %v119
  %v124 = vrsqrt.pop %v91
  %v125 = vmul.f32 %v124, %v91
  %v126 = vmul.f32 %v125, %v124
  %v127 = vmul.f32 0.5, %v126
  %v128 = vsub.f32 1.5, %v127
  %v129 = vmul.f32 %v124, %v128
  %vm130 = vweird.f32 %v91
  %vm131 = vweird.f32 %v124
  %vm132 = vmor %vm130, %vm131
  %v133 = vsel %vm132, %v124, %v129
  %v134 = vrsqrt.pop %v92
  %v135 = vmul.f32 %v134, %v92
  %v136 = vmul.f32 %v135, %v134
  %v137 = vmul.f32 0.5, %v136
  %v138 = vsub.f32 1.5, %v137
  %v139 = vmul.f32 %v134, %v138
  %vm140 = vweird.f32 %v92
  %vm141 = vweird.f32 %v134
  %vm142 = vmor %vm140, %vm141
  %v143 = vsel %vm142, %v134, %v139
  %v144 = vrsqrt.pop %v93
  %v145 = vmul.f32 %v144, %v93
  %v146 = vmul.f32 %v145, %v144
  %v147 = vmul.f32 0.5, %v146
  %v148 = vsub.f32 1.5, %v147
  %v149 = vmul.f32 %v144, %v148
  %vm150 = vweird.f32 %v93
  %vm151 = vweird.f32 %v144
  %vm152 = vmor %vm150, %vm151
  %v153 = vsel %vm152, %v144, %v149
  %v154 = vmul.f32 %v52, %v103
  %v155 = vmul.f32 %v53, %v113
  %v156 = vmul.f32 %v54, %v123
  %v157 = vmul.f32 %v55, %v133
  %v158 = vmul.f32 %v56, %v143
  %v159 = vmul.f32 %v57, %v153
  %v160 = vld [vmem:[%s1] sm:$0x1]
  %v162 = vperm.slane %v160, 0
  %v164 = vmul.f32 %v154, %v162
  %v165 = vmul.f32 %v155, %v162
  %v166 = vmul.f32 %v156, %v162
  %v167 = vmul.f32 %v157, %v162
  %v168 = vmul.f32 %v158, %v162
  %v169 = vmul.f32 %v159, %v162
  %v170 = vld [vmem:[%s2] sm:$0x1]
  %v172 = vperm.slane %v170, 0
  %v174 = vadd.f32 %v164, %v172
  %v175 = vadd.f32 %v165, %v172
  %v176 = vadd.f32 %v166, %v172
  %v177 = vadd.f32 %v167, %v172
  %v178 = vadd.f32 %v168, %v172
  %v179 = vadd.f32 %v169, %v172
  %180 = vst.msk [vmem:[%s3] sm:$0xff] %vm20, %v174
  %181 = vst.msk [vmem:[%s3 + $0x8] sm:$0xff] %vm20, %v175
  %182 = vst.msk [vmem:[%s3 + $0x10] sm:$0xff] %vm20, %v176
  %183 = vst.msk [vmem:[%s3 + $0x18] sm:$0xff] %vm20, %v177
  %184 = vst.msk [vmem:[%s3 + $0x20] sm:$0xff] %vm20, %v178
  %185 = vst.msk [vmem:[%s3 + $0x28] sm:$0xff] %vm20, %v179
  // Predicated region
  $region14: #{tpu_custom_call.1} parent=0 // pred_check
    _
  $region15: #{tpu_custom_call.1} parent=0 // pred_check_branch
    %187 = sbr.rel (0) target = $region17
  $region16: #{tpu_custom_call.1} parent=0 // pred_region
    _
  $region17: #{tpu_custom_call.1} parent=0 // pred_fallthru
    _
  // Predicated region
  $region18: #{tpu_custom_call.1} parent=0 // pred_check
    _
  $region19: #{tpu_custom_call.1} parent=0 // pred_check_branch
    %189 = sbr.rel (0) target = $region21
  $region20: #{tpu_custom_call.1} parent=0 // pred_region
    _
  $region21: #{tpu_custom_call.1} parent=0 // pred_fallthru
    _

</llo_original>
